<compile_context>
chip_gen: v7x
topology: tpu7x:2x2x1
jax: 0.10.0
libtpu: 0.0.40
codegen_flags: <defaults>
</compile_context>

<pallas_src>
import math
from functools import partial

import jax
import jax.numpy as jnp
from jax.experimental import pallas as pl
from jax.experimental.pallas import tpu as pltpu


def _tefn_kernel(x_ref, m_ref, wx_ref, wm_ref, eb_ref,
                 ts_ref, to_ref, cs_ref, co_ref, out_ref):
    x = x_ref[...]                                   # (C, Rb) f32
    m = m_ref[...].astype(jnp.float32)               # (C, Rb) bf16 -> f32 (VPU math stays f32)

    # SaitsEmbedding: Linear(concat([X, mask], -1)) in transposed layout:
    #   enc_T = Wx @ X_T + Wm @ M_T + b   (weights used untransposed; MXU)
    enc = (jnp.dot(wx_ref[...], x, preferred_element_type=jnp.float32)
           + jnp.dot(wm_ref[...], m, preferred_element_type=jnp.float32)
           + eb_ref[...])                            # (C, Rb)

    # BackboneTEFN with the F axis collapsed on the host:
    #   backbone = enc * (t_scale[lane] + c_scale[c]) + (t_off[lane] + c_off[c])
    scale = ts_ref[...] + cs_ref[...]                # (1,Rb) + (C,1) -> (C,Rb)
    offset = to_ref[...] + co_ref[...]
    backbone = enc * scale + offset

    # imputation: missing_mask * X + (1 - missing_mask) * out   (single fused, lane-dense store)
    out_ref[...] = m * x + (1.0 - m) * backbone


def _round_up(a, b):
    return ((a + b - 1) // b) * b


def _choose_lane_tile(R, T, lane_block):
    """Pick lane-tile size Rb and whether time-axis vectors can be a resident block."""
    lcmv = 128 * T // math.gcd(128, T)
    t_aligned = lcmv <= 8192                 # T-aligned tiles affordable?
    step = lcmv if t_aligned else 128
    cap = _round_up(-(-R // 8), step)        # aim for >= ~8 grid steps when R is large
    Rb = min(_round_up(max(lane_block, step), step), cap)
    if Rb >= R:
        return R, True                       # single full block; R = B*T is a multiple of T
    return Rb, t_aligned


@partial(jax.jit, static_argnames=("lane_block",))
def tefn_forward(X, missing_mask, params, lane_block=2048):
    """X, missing_mask: (B, T, C) float32. Returns imputed data (B, T, C) float32."""
    f32 = jnp.float32
    B, T, C = X.shape
    R = B * T

    # ---- host-side prep: F-collapse, lane-major views ----
    t_scale = jnp.sum(params["t_weight"], axis=-1).astype(f32)          # (T,)
    t_off = jnp.sum(params["t_bias"], axis=-1).astype(f32)              # (T,)
    c_scale = jnp.sum(params["c_weight"], axis=-1).reshape(C, 1).astype(f32)
    c_off = jnp.sum(params["c_bias"], axis=-1).reshape(C, 1).astype(f32)

    wx = params["emb_w_x"].astype(f32)                                  # (C, C) used as-is
    wm = params["emb_w_m"].astype(f32)                                  # (C, C)
    eb = params["emb_b"].reshape(C, 1).astype(f32)                      # (C, 1)

    # lane = b*T + t
    xT = jnp.transpose(X, (2, 0, 1)).reshape(C, R).astype(f32)
    mT = jnp.transpose(missing_mask, (2, 0, 1)).reshape(C, R).astype(jnp.bfloat16)

    Rb, t_resident = _choose_lane_tile(R, T, lane_block)
    grid = (pl.cdiv(R, Rb),)

    if t_resident:
        # Tiles are aligned to T -> per-tile time pattern is identical every step:
        # tiny resident block, fetched once (constant block index).
        reps = Rb // T
        ts_arr = jnp.tile(t_scale, reps).reshape(1, Rb)
        to_arr = jnp.tile(t_off, reps).reshape(1, Rb)
        t_spec = pl.BlockSpec((1, Rb), lambda i: (0, 0))
    else:
        # Fallback: lane-dense streamed per-lane time vectors.
        ts_arr = jnp.tile(t_scale, B).reshape(1, R)
        to_arr = jnp.tile(t_off, B).reshape(1, R)
        t_spec = pl.BlockSpec((1, Rb), lambda i: (0, i))

    lane_spec = pl.BlockSpec((C, Rb), lambda i: (0, i))

    def resident(shape):
        return pl.BlockSpec(shape, lambda i: (0, 0))

    outT = pl.pallas_call(
        _tefn_kernel,
        out_shape=jax.ShapeDtypeStruct((C, R), f32),
        grid=grid,
        in_specs=[
            lane_spec, lane_spec,                    # X_T (f32), mask_T (bf16)
            resident((C, C)), resident((C, C)),      # embedding weights (X / mask halves)
            resident((C, 1)),                        # embedding bias
            t_spec, t_spec,                          # time-axis scale / offset (lane-dense)
            resident((C, 1)), resident((C, 1)),      # feature-axis scale / offset
        ],
        out_specs=lane_spec,
        compiler_params=pltpu.CompilerParams(dimension_semantics=("parallel",)),
    )(xT, mT, wx, wm, eb, ts_arr, to_arr, c_scale, c_off)

    return jnp.transpose(outT.reshape(C, B, T), (1, 2, 0))


def _reference(X, missing_mask, params):
    enc = X @ params["emb_w_x"].T + missing_mask @ params["emb_w_m"].T + params["emb_b"]
    t_out = (enc[..., None] * params["t_weight"][None, :, None, :]
             + params["t_bias"][None, :, None, :])
    c_out = (enc[..., None] * params["c_weight"][None, None, :, :]
             + params["c_bias"][None, None, :, :])
    backbone = jnp.sum(t_out + c_out, axis=-1)
    return missing_mask * X + (1.0 - missing_mask) * backbone


if __name__ == "__main__":
    key = jax.random.PRNGKey(0)

    def make_case(case_key, B, T, C, n_fod):
        F = 2 ** n_fod
        k = jax.random.split(case_key, 8)
        X_full = jax.random.normal(k[0], (B, T, C), jnp.float32)
        missing_mask = (jax.random.uniform(k[1], (B, T, C)) > 0.3).astype(jnp.float32)
        X = X_full * missing_mask        # missing entries zeroed, as in PyPOTS preprocessing
        # SaitsEmbedding: Linear(2C -> C) -> weight (C, 2C), bias (C,)
        # EvidenceMachineKernel(T, n_fod) / (C, n_fod): weight/bias (T|C, 2**n_fod)
        emb_w = jax.random.normal(k[2], (C, 2 * C), jnp.float32) * 0.1
        params = {
            "emb_w_x": emb_w[:, :C],
            "emb_w_m": emb_w[:, C:],
            "emb_b": jax.random.normal(k[3], (1, C), jnp.float32) * 0.1,
            "t_weight": jax.random.uniform(k[4], (T, F), jnp.float32),
            "t_bias": jax.random.uniform(k[5], (T, F), jnp.float32),
            "c_weight": jax.random.uniform(k[6], (C, F), jnp.float32),
            "c_bias": jax.random.uniform(k[7], (C, F), jnp.float32),
        }
        return X, missing_mask, params

    cases = [
        # name,        B,   T,  C, n_fod, lane_block
        ("tiny",        2,   8,  4, 2, 2048),   # single full-block tile (R = 16)
        ("multi-step", 128, 24,  5, 3, 2048),   # 8-step grid, T-aligned tiles, resident t-vectors
        ("ragged",       7, 65,  9, 1, 2048),   # streamed t-vectors + partial edge tile (R = 455)
    ]
    case_keys = jax.random.split(key, len(cases))
    for ck, (name, B, T, C, n_fod, lane_block) in zip(case_keys, cases):
        X, missing_mask, params = make_case(ck, B, T, C, n_fod)
        out = jax.block_until_ready(
            tefn_forward(X, missing_mask, params, lane_block=lane_block))
        ref = _reference(X, missing_mask, params)
        assert out.shape == (B, T, C)
        assert jnp.allclose(out, ref, atol=1e-4, rtol=1e-4), \
            f"Pallas output mismatch vs reference ({name})"

    print("KERNEL_OK")
</pallas_src>

<mosaic_0001>
module attributes {stable_mosaic.version = 11 : i64} {
  func.func @_tefn_kernel(%arg0: i32, %arg1: memref<4x16xf32, #tpu.memory_space<vmem>>, %arg2: memref<4x16xbf16, #tpu.memory_space<vmem>>, %arg3: memref<4x4xf32, #tpu.memory_space<vmem>>, %arg4: memref<4x4xf32, #tpu.memory_space<vmem>>, %arg5: memref<4x1xf32, #tpu.memory_space<vmem>>, %arg6: memref<1x16xf32, #tpu.memory_space<vmem>>, %arg7: memref<1x16xf32, #tpu.memory_space<vmem>>, %arg8: memref<4x1xf32, #tpu.memory_space<vmem>>, %arg9: memref<4x1xf32, #tpu.memory_space<vmem>>, %arg10: memref<4x16xf32, #tpu.memory_space<vmem>>) attributes {dimension_semantics = [#tpu.dimension_semantics<parallel>], iteration_bounds = array<i64: 1>, scalar_prefetch = 0 : i64, scratch_operands = 0 : i64, tpu.core_type = #tpu.core_type<tc>, window_params = [{transform_indices = @transform_0, window_bounds = array<i64: 4, 16>}, {transform_indices = @transform_1, window_bounds = array<i64: 4, 16>}, {pipeline_mode = #tpu.pipeline_mode<synchronous>, transform_indices = @transform_2, window_bounds = array<i64: 4, 4>}, {pipeline_mode = #tpu.pipeline_mode<synchronous>, transform_indices = @transform_3, window_bounds = array<i64: 4, 4>}, {pipeline_mode = #tpu.pipeline_mode<synchronous>, transform_indices = @transform_4, window_bounds = array<i64: 4, 1>}, {pipeline_mode = #tpu.pipeline_mode<synchronous>, transform_indices = @transform_5, window_bounds = array<i64: 1, 16>}, {pipeline_mode = #tpu.pipeline_mode<synchronous>, transform_indices = @transform_6, window_bounds = array<i64: 1, 16>}, {pipeline_mode = #tpu.pipeline_mode<synchronous>, transform_indices = @transform_7, window_bounds = array<i64: 4, 1>}, {pipeline_mode = #tpu.pipeline_mode<synchronous>, transform_indices = @transform_8, window_bounds = array<i64: 4, 1>}, {transform_indices = @transform_9, window_bounds = array<i64: 4, 16>}]} {
    %c0 = arith.constant 0 : index
    %c0_0 = arith.constant 0 : index
    %0 = vector.load %arg1[%c0, %c0_0] : memref<4x16xf32, #tpu.memory_space<vmem>>, vector<4x16xf32>
    %c0_1 = arith.constant 0 : index
    %c0_2 = arith.constant 0 : index
    %1 = vector.load %arg2[%c0_1, %c0_2] : memref<4x16xbf16, #tpu.memory_space<vmem>>, vector<4x16xbf16>
    %2 = arith.extf %1 : vector<4x16xbf16> to vector<4x16xf32>
    %c0_3 = arith.constant 0 : index
    %c0_4 = arith.constant 0 : index
    %3 = vector.load %arg3[%c0_3, %c0_4] : memref<4x4xf32, #tpu.memory_space<vmem>>, vector<4x4xf32>
    %cst = arith.constant dense<0.000000e+00> : vector<4x16xf32>
    %4 = tpu.matmul %3, %0, %cst {dimension_numbers = #tpu.dot_dimension_numbers<[1], [0], [0], [1], [0, 0, 1, 1], [], []>} : vector<4x4xf32>, vector<4x16xf32>, vector<4x16xf32> -> vector<4x16xf32>
    %c0_5 = arith.constant 0 : index
    %c0_6 = arith.constant 0 : index
    %5 = vector.load %arg4[%c0_5, %c0_6] : memref<4x4xf32, #tpu.memory_space<vmem>>, vector<4x4xf32>
    %cst_7 = arith.constant dense<0.000000e+00> : vector<4x16xf32>
    %6 = tpu.matmul %5, %2, %cst_7 {dimension_numbers = #tpu.dot_dimension_numbers<[1], [0], [0], [1], [0, 0, 1, 1], [], []>} : vector<4x4xf32>, vector<4x16xf32>, vector<4x16xf32> -> vector<4x16xf32>
    %7 = arith.addf %4, %6 : vector<4x16xf32>
    %c0_8 = arith.constant 0 : index
    %c0_9 = arith.constant 0 : index
    %8 = vector.load %arg5[%c0_8, %c0_9] : memref<4x1xf32, #tpu.memory_space<vmem>>, vector<4x1xf32>
    %9 = vector.broadcast %8 : vector<4x1xf32> to vector<4x16xf32>
    %10 = arith.addf %7, %9 : vector<4x16xf32>
    %c0_10 = arith.constant 0 : index
    %c0_11 = arith.constant 0 : index
    %11 = vector.load %arg6[%c0_10, %c0_11] : memref<1x16xf32, #tpu.memory_space<vmem>>, vector<1x16xf32>
    %c0_12 = arith.constant 0 : index
    %c0_13 = arith.constant 0 : index
    %12 = vector.load %arg8[%c0_12, %c0_13] : memref<4x1xf32, #tpu.memory_space<vmem>>, vector<4x1xf32>
    %13 = vector.broadcast %11 : vector<1x16xf32> to vector<4x16xf32>
    %14 = vector.broadcast %12 : vector<4x1xf32> to vector<4x16xf32>
    %15 = arith.addf %13, %14 : vector<4x16xf32>
    %c0_14 = arith.constant 0 : index
    %c0_15 = arith.constant 0 : index
    %16 = vector.load %arg7[%c0_14, %c0_15] : memref<1x16xf32, #tpu.memory_space<vmem>>, vector<1x16xf32>
    %c0_16 = arith.constant 0 : index
    %c0_17 = arith.constant 0 : index
    %17 = vector.load %arg9[%c0_16, %c0_17] : memref<4x1xf32, #tpu.memory_space<vmem>>, vector<4x1xf32>
    %18 = vector.broadcast %16 : vector<1x16xf32> to vector<4x16xf32>
    %19 = vector.broadcast %17 : vector<4x1xf32> to vector<4x16xf32>
    %20 = arith.addf %18, %19 : vector<4x16xf32>
    %21 = arith.mulf %10, %15 : vector<4x16xf32>
    %22 = arith.addf %21, %20 : vector<4x16xf32>
    %23 = arith.mulf %2, %0 : vector<4x16xf32>
    %cst_18 = arith.constant 1.000000e+00 : f32
    %24 = vector.broadcast %cst_18 : f32 to vector<4x16xf32>
    %25 = arith.subf %24, %2 : vector<4x16xf32>
    %26 = arith.mulf %25, %22 : vector<4x16xf32>
    %27 = arith.addf %23, %26 : vector<4x16xf32>
    %c0_19 = arith.constant 0 : index
    %c0_20 = arith.constant 0 : index
    %28 = vector.load %arg10[%c0_19, %c0_20] : memref<4x16xf32, #tpu.memory_space<vmem>>, vector<4x16xf32>
    tpu.vector_store %arg10[%c0_19, %c0_20], %27 {strides = array<i32>} : memref<4x16xf32, #tpu.memory_space<vmem>>, vector<4x16xf32>,
    return
  }
  func.func @transform_0(%arg0: i32) -> (i32, i32) {
    %c0_i32 = arith.constant 0 : i32
    %c0_i32_0 = arith.constant 0 : i32
    return %c0_i32, %arg0 : i32, i32
  }
  func.func @transform_1(%arg0: i32) -> (i32, i32) {
    %c0_i32 = arith.constant 0 : i32
    %c0_i32_0 = arith.constant 0 : i32
    return %c0_i32, %arg0 : i32, i32
  }
  func.func @transform_2(%arg0: i32) -> (i32, i32) {
    %c0_i32 = arith.constant 0 : i32
    %c0_i32_0 = arith.constant 0 : i32
    %c0_i32_1 = arith.constant 0 : i32
    return %c0_i32, %c0_i32_0 : i32, i32
  }
  func.func @transform_3(%arg0: i32) -> (i32, i32) {
    %c0_i32 = arith.constant 0 : i32
    %c0_i32_0 = arith.constant 0 : i32
    %c0_i32_1 = arith.constant 0 : i32
    return %c0_i32, %c0_i32_0 : i32, i32
  }
  func.func @transform_4(%arg0: i32) -> (i32, i32) {
    %c0_i32 = arith.constant 0 : i32
    %c0_i32_0 = arith.constant 0 : i32
    %c0_i32_1 = arith.constant 0 : i32
    return %c0_i32, %c0_i32_0 : i32, i32
  }
  func.func @transform_5(%arg0: i32) -> (i32, i32) {
    %c0_i32 = arith.constant 0 : i32
    %c0_i32_0 = arith.constant 0 : i32
    %c0_i32_1 = arith.constant 0 : i32
    return %c0_i32, %c0_i32_0 : i32, i32
  }
  func.func @transform_6(%arg0: i32) -> (i32, i32) {
    %c0_i32 = arith.constant 0 : i32
    %c0_i32_0 = arith.constant 0 : i32
    %c0_i32_1 = arith.constant 0 : i32
    return %c0_i32, %c0_i32_0 : i32, i32
  }
  func.func @transform_7(%arg0: i32) -> (i32, i32) {
    %c0_i32 = arith.constant 0 : i32
    %c0_i32_0 = arith.constant 0 : i32
    %c0_i32_1 = arith.constant 0 : i32
    return %c0_i32, %c0_i32_0 : i32, i32
  }
  func.func @transform_8(%arg0: i32) -> (i32, i32) {
    %c0_i32 = arith.constant 0 : i32
    %c0_i32_0 = arith.constant 0 : i32
    %c0_i32_1 = arith.constant 0 : i32
    return %c0_i32, %c0_i32_0 : i32, i32
  }
  func.func @transform_9(%arg0: i32) -> (i32, i32) {
    %c0_i32 = arith.constant 0 : i32
    %c0_i32_0 = arith.constant 0 : i32
    return %c0_i32, %arg0 : i32, i32
  }
}

</mosaic_0001>

<llo_original>
// kernel: tile.13
$region0: #{tile.13}
  #allocation0 [shape = 's32[1]{0}', space=sflag, size = 0x4, scoped, tag = 'scoped memory for tile.13']
  %s0 = inlined_call_operand.vmem [shape: f32[8], index: 0, kind: input, shape index: {}]
  %s1 = inlined_call_operand.vmem [shape: f32[2,8], index: 1, kind: output, shape index: {}]
  // Predicated region
  $region2: #{tile.13} parent=0 // pred_check
    _
  $region3: #{tile.13} parent=0 // pred_check_branch
    %3 = sbr.rel (0) target = $region5
  $region4: #{tile.13} parent=0 // pred_region
    _
  $region5: #{tile.13} parent=0 // pred_fallthru
    _
  %v4 = vld [vmem:[%s0] ss:$0 sm:$0xff]
  %5 = vst [vmem:[%s1] sm:$0x3] %v4

// kernel: tile.14
$region0: #{tile.14}
  %s0 = inlined_call_operand.vmem [shape: f32[2,8], index: 0, kind: input, shape index: {}]
  %s1 = inlined_call_operand.vmem [shape: f32[1,16], index: 1, kind: output, shape index: {}]
  $region1: #{tile.14} parent=0
    #allocation0 [shape = 'u8[4096]{0}', space=vmem, size = 0x1000, scoped, tag = 'scoped mem for output reshape']
    #allocation1 [shape = 'u8[4096]{0}', space=vmem, size = 0x1000, scoped, tag = 'scoped mem for input reshape']
    %s3 = sshllo.u32 0, 2
    %v4 = vld [vmem:[%s0] sm:%s3]
    %5 = vst [vmem:[#allocation1] sm:%s3] %v4
    %v6 = vld [vmem:[#allocation1] sm:$0x1]
    %vm7 = vcmask 64512
    %8 = vst.msk [vmem:[#allocation0] sm:$0x1] %vm7, %v6
    %s9 = scalar_lea.vmem [#allocation1], 1
    %v10 = vld [vmem:[%s9] sm:$0x1]
    %11 = vrot.lane.b32.xlu0 %v10, 8
    %v12 = vpop.permute.xlu0 %11
    %vm13 = vcmask 130112
    %14 = vst.msk [vmem:[#allocation0] sm:$0x1] %vm13, %v12
    %s16 = sshllo.u32 0, 1
    %v18 = vld [vmem:[#allocation0] sm:%s16]
    %s19 = sshllo.u32 0, 1
    %20 = vst [vmem:[%s1] sm:%s19] %v18

// kernel: tefn_forward.1
$region0: #{tefn_forward.1}
  #allocation0 [shape = 'u32[]', space=smem, size = 0x4, offset = 0x4, fixed_abs, tag = 'smem constant byte address 0x4 - core index']
  #allocation1 [shape = 'u32[144,128]{1,0:T(1,128)}', space=vmem, size = 0x12000, scoped, tag = 'internal scratch']
  %s0 = inlined_call_operand.vmem [shape: f32[4,16], index: 0, kind: input, shape index: {}]
  %s1 = inlined_call_operand.vmem [shape: bf16[4,16], index: 1, kind: input, shape index: {}]
  %s2 = inlined_call_operand.vmem [shape: f32[4,4], index: 2, kind: input, shape index: {}]
  %s3 = inlined_call_operand.vmem [shape: f32[4,4], index: 3, kind: input, shape index: {}]
  %s4 = inlined_call_operand.vmem [shape: f32[4,1], index: 4, kind: input, shape index: {}]
  %s5 = inlined_call_operand.vmem [shape: f32[1,16], index: 5, kind: input, shape index: {}]
  %s6 = inlined_call_operand.vmem [shape: f32[1,16], index: 6, kind: input, shape index: {}]
  %s7 = inlined_call_operand.vmem [shape: f32[4,1], index: 7, kind: input, shape index: {}]
  %s8 = inlined_call_operand.vmem [shape: f32[4,1], index: 8, kind: input, shape index: {}]
  %s9 = inlined_call_operand.vmem [shape: f32[4,16], index: 9, kind: output, shape index: {}]
  %s10 = sld [smem:[#allocation0]]
  $region46: #{tefn_forward.1} parent=0
    _
  %s12 = ssub.s32 1, %s10
  %s13 = scalar_select 0, %s12, %s10
  // Predicated region
  $region2: #{tefn_forward.1} parent=0 // pred_check
    _
  $region3: #{tefn_forward.1} parent=0 // pred_check_branch
    %15 = sbr.rel (0) target = $region5
  $region4: #{tefn_forward.1} parent=0 // pred_region
    _
  $region5: #{tefn_forward.1} parent=0 // pred_fallthru
    _
  // Predicated region
  $region6: #{tefn_forward.1} parent=0 // pred_check
    _
  $region7: #{tefn_forward.1} parent=0 // pred_check_branch
    %17 = sbr.rel (0) target = $region9
  $region8: #{tefn_forward.1} parent=0 // pred_region
    _
  $region9: #{tefn_forward.1} parent=0 // pred_fallthru
    _
  // Predicated region
  $region10: #{tefn_forward.1} parent=0 // pred_check
    _
  $region11: #{tefn_forward.1} parent=0 // pred_check_branch
    %19 = sbr.rel (0) target = $region13
  $region12: #{tefn_forward.1} parent=0 // pred_region
    _
  $region13: #{tefn_forward.1} parent=0 // pred_fallthru
    _
  // Predicated region
  $region14: #{tefn_forward.1} parent=0 // pred_check
    _
  $region15: #{tefn_forward.1} parent=0 // pred_check_branch
    %21 = sbr.rel (0) target = $region17
  $region16: #{tefn_forward.1} parent=0 // pred_region
    _
  $region17: #{tefn_forward.1} parent=0 // pred_fallthru
    _
  // Predicated region
  $region18: #{tefn_forward.1} parent=0 // pred_check
    _
  $region19: #{tefn_forward.1} parent=0 // pred_check_branch
    %23 = sbr.rel (0) target = $region21
  $region20: #{tefn_forward.1} parent=0 // pred_region
    _
  $region21: #{tefn_forward.1} parent=0 // pred_fallthru
    _
  // Predicated region
  $region22: #{tefn_forward.1} parent=0 // pred_check
    _
  $region23: #{tefn_forward.1} parent=0 // pred_check_branch
    %25 = sbr.rel (0) target = $region25
  $region24: #{tefn_forward.1} parent=0 // pred_region
    _
  $region25: #{tefn_forward.1} parent=0 // pred_fallthru
    _
  // Predicated region
  $region26: #{tefn_forward.1} parent=0 // pred_check
    _
  $region27: #{tefn_forward.1} parent=0 // pred_check_branch
    %27 = sbr.rel (0) target = $region29
  $region28: #{tefn_forward.1} parent=0 // pred_region
    _
  $region29: #{tefn_forward.1} parent=0 // pred_fallthru
    _
  // Predicated region
  $region30: #{tefn_forward.1} parent=0 // pred_check
    _
  $region31: #{tefn_forward.1} parent=0 // pred_check_branch
    %29 = sbr.rel (0) target = $region33
  $region32: #{tefn_forward.1} parent=0 // pred_region
    _
  $region33: #{tefn_forward.1} parent=0 // pred_fallthru
    _
  // Predicated region
  $region34: #{tefn_forward.1} parent=0 // pred_check
    _
  $region35: #{tefn_forward.1} parent=0 // pred_check_branch
    %31 = sbr.rel (0) target = $region37
  $region36: #{tefn_forward.1} parent=0 // pred_region
    _
  $region37: #{tefn_forward.1} parent=0 // pred_fallthru
    _
  %v32 = vld [vmem:[%s0] sm:$0xf]
  %v33 = vld [vmem:[%s1] sm:$0x3]
  %v34 = vunpack.c.l.bf16 %v33
  %v35 = vld [vmem:[%s2] sm:$0xf]
  %v36 = vld [vmem:[%s3] sm:$0xf]
  %vm37 = vcmask 31744
  %v39 = vsel %vm37, %v36, 0
  %vm41 = vcmask 1043456
  %v43 = vsel %vm41, %v34, 0
  %45 = vmatprep.subr.mxu0 0.0
  %46 = vmatpush1.msra.mxu0 %v43
  %47 = vmatprep.subr.mxu0 0.0
  %48 = vmatpush1.msra.mxu0 0.0
  %49 = vmatprep.subr.mxu0 0.0
  %50 = vmatpush1.msra.mxu0 0.0
  %51 = vmatprep.subr.mxu0 0.0
  %52 = vmatpush1.msra.mxu0 0.0
  %53 = vmatprep.subr.mxu0 0.0
  %54 = vmatpush1.msra.mxu0 0.0
  %55 = vmatprep.subr.mxu0 0.0
  %56 = vmatpush1.msra.mxu0 0.0
  %57 = vmatprep.subr.mxu0 0.0
  %58 = vmatpush1.msra.mxu0 0.0
  %59 = vmatprep.subr.mxu0 0.0
  %60 = vmatpush1.msra.mxu0 0.0
  %61 = vmatprep.subr.mxu0 0.0
  %62 = vmatpush1.msra.mxu0 0.0
  %63 = vmatprep.subr.mxu0 0.0
  %64 = vmatpush1.msra.mxu0 0.0
  %65 = vmatprep.subr.mxu0 0.0
  %66 = vmatpush1.msra.mxu0 0.0
  %67 = vmatprep.subr.mxu0 0.0
  %68 = vmatpush1.msra.mxu0 0.0
  %69 = vmatprep.subr.mxu0 0.0
  %70 = vmatpush1.msra.mxu0 0.0
  %71 = vmatprep.subr.mxu0 0.0
  %72 = vmatpush1.msra.mxu0 0.0
  %73 = vmatprep.subr.mxu0 0.0
  %74 = vmatpush1.msra.mxu0 0.0
  %75 = vmatprep.subr.mxu0 0.0
  %76 = vmatpush1.msra.mxu0 0.0
  %77 = vmatprep.subr.mxu0 0.0
  %78 = vmatpush1.msra.mxu0 0.0
  %79 = vmatprep.subr.mxu0 0.0
  %80 = vmatpush1.msra.mxu0 0.0
  %81 = vmatprep.subr.mxu0 0.0
  %82 = vmatpush1.msra.mxu0 0.0
  %83 = vmatprep.subr.mxu0 0.0
  %84 = vmatpush1.msra.mxu0 0.0
  %85 = vmatprep.subr.mxu0 0.0
  %86 = vmatpush1.msra.mxu0 0.0
  %87 = vmatprep.subr.mxu0 0.0
  %88 = vmatpush1.msra.mxu0 0.0
  %89 = vmatprep.subr.mxu0 0.0
  %90 = vmatpush1.msra.mxu0 0.0
  %91 = vmatprep.subr.mxu0 0.0
  %92 = vmatpush1.msra.mxu0 0.0
  %93 = vmatprep.subr.mxu0 0.0
  %94 = vmatpush1.msra.mxu0 0.0
  %95 = vmatprep.subr.mxu0 0.0
  %96 = vmatpush1.msra.mxu0 0.0
  %97 = vmatprep.subr.mxu0 0.0
  %98 = vmatpush1.msra.mxu0 0.0
  %99 = vmatprep.subr.mxu0 0.0
  %100 = vmatpush1.msra.mxu0 0.0
  %101 = vmatprep.subr.mxu0 0.0
  %102 = vmatpush1.msra.mxu0 0.0
  %103 = vmatprep.subr.mxu0 0.0
  %104 = vmatpush1.msra.mxu0 0.0
  %105 = vmatprep.subr.mxu0 0.0
  %106 = vmatpush1.msra.mxu0 0.0
  %107 = vmatprep.subr.mxu0 0.0
  %108 = vmatpush1.msra.mxu0 0.0
  %109 = vmatprep.mubr.f32.mxu0 0.0
  %110 = vmatmul.mubr.f32.gmra.mrb[0].mxu0 %v39
  %v111 = vpop.f32.mrb[0].mxu0
  %v112 = vadd.f32 0.0, %v111
  %v113 = vpop.f32.mrb[0].mxu0
  %114 = vdwg.mxu0
  %v116 = vsel %vm37, %v35, 0
  %v119 = vsel %vm41, %v32, 0
  %121 = vmatprep.subr.mxu0 0.0
  %122 = vmatpush1.msra.mxu0 %v119
  %123 = vmatprep.subr.mxu0 0.0
  %124 = vmatpush1.msra.mxu0 0.0
  %125 = vmatprep.subr.mxu0 0.0
  %126 = vmatpush1.msra.mxu0 0.0
  %127 = vmatprep.subr.mxu0 0.0
  %128 = vmatpush1.msra.mxu0 0.0
  %129 = vmatprep.subr.mxu0 0.0
  %130 = vmatpush1.msra.mxu0 0.0
  %131 = vmatprep.subr.mxu0 0.0
  %132 = vmatpush1.msra.mxu0 0.0
  %133 = vmatprep.subr.mxu0 0.0
  %134 = vmatpush1.msra.mxu0 0.0
  %135 = vmatprep.subr.mxu0 0.0
  %136 = vmatpush1.msra.mxu0 0.0
  %137 = vmatprep.subr.mxu0 0.0
  %138 = vmatpush1.msra.mxu0 0.0
  %139 = vmatprep.subr.mxu0 0.0
  %140 = vmatpush1.msra.mxu0 0.0
  %141 = vmatprep.subr.mxu0 0.0
  %142 = vmatpush1.msra.mxu0 0.0
  %143 = vmatprep.subr.mxu0 0.0
  %144 = vmatpush1.msra.mxu0 0.0
  %145 = vmatprep.subr.mxu0 0.0
  %146 = vmatpush1.msra.mxu0 0.0
  %147 = vmatprep.subr.mxu0 0.0
  %148 = vmatpush1.msra.mxu0 0.0
  %149 = vmatprep.subr.mxu0 0.0
  %150 = vmatpush1.msra.mxu0 0.0
  %151 = vmatprep.subr.mxu0 0.0
  %152 = vmatpush1.msra.mxu0 0.0
  %153 = vmatprep.subr.mxu0 0.0
  %154 = vmatpush1.msra.mxu0 0.0
  %155 = vmatprep.subr.mxu0 0.0
  %156 = vmatpush1.msra.mxu0 0.0
  %157 = vmatprep.subr.mxu0 0.0
  %158 = vmatpush1.msra.mxu0 0.0
  %159 = vmatprep.subr.mxu0 0.0
  %160 = vmatpush1.msra.mxu0 0.0
  %161 = vmatprep.subr.mxu0 0.0
  %162 = vmatpush1.msra.mxu0 0.0
  %163 = vmatprep.subr.mxu0 0.0
  %164 = vmatpush1.msra.mxu0 0.0
  %165 = vmatprep.subr.mxu0 0.0
  %166 = vmatpush1.msra.mxu0 0.0
  %167 = vmatprep.subr.mxu0 0.0
  %168 = vmatpush1.msra.mxu0 0.0
  %169 = vmatprep.subr.mxu0 0.0
  %170 = vmatpush1.msra.mxu0 0.0
  %171 = vmatprep.subr.mxu0 0.0
  %172 = vmatpush1.msra.mxu0 0.0
  %173 = vmatprep.subr.mxu0 0.0
  %174 = vmatpush1.msra.mxu0 0.0
  %175 = vmatprep.subr.mxu0 0.0
  %176 = vmatpush1.msra.mxu0 0.0
  %177 = vmatprep.subr.mxu0 0.0
  %178 = vmatpush1.msra.mxu0 0.0
  %179 = vmatprep.subr.mxu0 0.0
  %180 = vmatpush1.msra.mxu0 0.0
  %181 = vmatprep.subr.mxu0 0.0
  %182 = vmatpush1.msra.mxu0 0.0
  %183 = vmatprep.subr.mxu0 0.0
  %184 = vmatpush1.msra.mxu0 0.0
  %185 = vmatprep.mubr.f32.mxu0 0.0
  %186 = vmatmul.mubr.f32.gmra.mrb[0].mxu0 %v116
  %v187 = vpop.f32.mrb[0].mxu0
  %v188 = vadd.f32 %v112, %v187
  %v189 = vpop.f32.mrb[0].mxu0
  %190 = vdwg.mxu0
  %v191 = vld [vmem:[%s4] sm:$0xf]
  %193 = vset.pattern.permute.xlu0 0
  %194 = vperm.xlu0 %193, %v191
  %v195 = vpop.permute.xlu0 %194
  %v197 = vadd.f32 %v188, %v195
  %v198 = vld [vmem:[%s5] sm:$0x1]
  %v199 = vld [vmem:[%s7] sm:$0xf]
  %v201 = vlaneseq
  %v202 = vshrl.u32 %v201, 7
  %v203 = vsub.s32 0, %v202
  %v204 = vrot.slane %v198, %v203
  %207 = vset.pattern.permute.xlu0 0
  %208 = vperm.xlu0 %207, %v199
  %v209 = vpop.permute.xlu0 %208
  %v211 = vadd.f32 %v204, %v209
  %v212 = vld [vmem:[%s6] sm:$0x1]
  %v213 = vld [vmem:[%s8] sm:$0xf]
  %v215 = vlaneseq
  %v216 = vshrl.u32 %v215, 7
  %v217 = vsub.s32 0, %v216
  %v218 = vrot.slane %v212, %v217
  %221 = vset.pattern.permute.xlu0 0
  %222 = vperm.xlu0 %221, %v213
  %v223 = vpop.permute.xlu0 %222
  %v225 = vadd.f32 %v218, %v223
  %v226 = vmul.f32 %v197, %v211
  %v227 = vadd.f32 %v226, %v225
  %v228 = vmul.f32 %v34, %v32
  %v229 = vsub.f32 1.0, %v34
  %v230 = vmul.f32 %v229, %v227
  %v231 = vadd.f32 %v228, %v230
  %vm232 = vcmask 125952
  %233 = vst.msk [vmem:[%s9] sm:$0xf] %vm232, %v231
  // Predicated region
  $region38: #{tefn_forward.1} parent=0 // pred_check
    _
  $region39: #{tefn_forward.1} parent=0 // pred_check_branch
    %235 = sbr.rel (0) target = $region41
  $region40: #{tefn_forward.1} parent=0 // pred_region
    _
  $region41: #{tefn_forward.1} parent=0 // pred_fallthru
    _
  // Predicated region
  $region42: #{tefn_forward.1} parent=0 // pred_check
    _
  $region43: #{tefn_forward.1} parent=0 // pred_check_branch
    %237 = sbr.rel (0) target = $region45
  $region44: #{tefn_forward.1} parent=0 // pred_region
    _
  $region45: #{tefn_forward.1} parent=0 // pred_fallthru
    _

</llo_original>
